<compile_context>
chip_gen: v7x
topology: tpu7x:2x2x1
jax: 0.10.0
libtpu: 0.0.40
codegen_flags: <defaults>
</compile_context>

<pallas_src>
import functools

import jax
import jax.numpy as jnp
from jax.experimental import pallas as pl
from jax.experimental.pallas import tpu as pltpu

_LANE = 128
_SUBLANE = 8


def _round_up(x, m):
    return (x + m - 1) // m * m


# --------------------------------------------------------------------------- #
# Kernel: one (row-tile, k-tile) step of relu(X @ W + b)
# --------------------------------------------------------------------------- #
def _matmul_bias_relu_kernel(x_ref, w_ref, b_ref, o_ref, acc_ref):
    """x_ref: (tm, tk) lane-dense LHS tile (channels or im2col patches)
       w_ref: (tk, cout_p) BN-scale-folded weight tile
       b_ref: (1, cout_p)  folded BN bias
       o_ref: (tm, cout_p) lane-dense output tile
       acc_ref: (tm, cout_p) f32 accumulator, resident across the K axis."""
    k = pl.program_id(1)

    @pl.when(k == 0)
    def _():
        acc_ref[...] = jnp.zeros_like(acc_ref)

    acc_ref[...] += jnp.dot(x_ref[...], w_ref[...],
                            preferred_element_type=jnp.float32)

    @pl.when(k == pl.num_programs(1) - 1)
    def _():
        o_ref[...] = jnp.maximum(acc_ref[...] + b_ref[...], 0.0).astype(o_ref.dtype)


# --------------------------------------------------------------------------- #
# Generation-aware tile / VMEM budgeting
# --------------------------------------------------------------------------- #
def _vmem_capacity_bytes():
    try:
        return int(pltpu.get_tpu_info().vmem_capacity_bytes)
    except Exception:
        return 64 * 2**20  # conservative (v7x-sized) fallback


def _choose_block_k(k_pad0, cout_p, itemsize, budget_bytes):
    """Largest multiple-of-128 divisor of k_pad0 whose double-buffered weight
    tile fits `budget_bytes` (so no extra K padding is introduced)."""
    cap = max(budget_bytes // max(2 * cout_p * itemsize, 1), _LANE)
    n_units = k_pad0 // _LANE
    for div in range(n_units, 0, -1):
        if n_units % div == 0 and div * _LANE <= cap:
            return div * _LANE
    return _LANE


def _choose_block_rows(rows_total, k_pad, cout_p, lhs_itm, out_itm, budget_bytes):
    """Largest sublane-aligned row tile whose (double-buffered LHS + output +
    f32 accumulator) footprint fits `budget_bytes`."""
    per_row = 2 * k_pad * lhs_itm + 2 * cout_p * out_itm + cout_p * 4
    tm = int(budget_bytes // max(per_row, 1))
    tm = min(tm, 1024, _round_up(rows_total, _SUBLANE))
    tm = max(tm, _SUBLANE)
    return (tm // _SUBLANE) * _SUBLANE


# --------------------------------------------------------------------------- #
# Wrapper: Conv3d(bias=False) + BatchNorm3d(eval) + ReLU, PyTorch NCDHW layout
# --------------------------------------------------------------------------- #
def reduction_core_block(x_ncdhw, weight_oikkk, gamma, beta, running_mean,
                         running_var, *, stride, pad, eps=1e-5,
                         block_rows=None, block_k=None, compute_dtype=None):
    """x_ncdhw: (N, Cin, D, H, W); weight_oikkk: (Cout, Cin, KD, KH, KW)
       returns: (N, Cout, Do, Ho, Wo)"""
    n, cin, d, h, w = x_ncdhw.shape
    cout, cin_w, kd, kh, kw = weight_oikkk.shape
    assert cin == cin_w

    sd, sh, sw = stride if isinstance(stride, (tuple, list)) else (stride,) * 3
    pd, ph, pw = pad if isinstance(pad, (tuple, list)) else (pad,) * 3

    do = (d + 2 * pd - kd) // sd + 1
    ho = (h + 2 * ph - kh) // sh + 1
    wo = (w + 2 * pw - kw) // sw + 1

    out_dtype = x_ncdhw.dtype
    f32 = jnp.float32
    lhs_dtype = compute_dtype if compute_dtype is not None else f32

    # ---- BN(eval) folding: scale into the conv weight, bias kept separate ----
    inv_std = jax.lax.rsqrt(running_var.astype(f32) + eps)
    scale = gamma.astype(f32) * inv_std                          # (Cout,)
    bias = beta.astype(f32) - running_mean.astype(f32) * scale   # (Cout,)

    k_dim = kd * kh * kw * cin
    cout_p = _round_up(cout, _LANE)

    # (Cout,Cin,KD,KH,KW) -> (zd,zh,zw,ci,Cout) -> (K, Cout); matches the tap
    # ordering used to build the LHS patches below.
    w2d = jnp.transpose(weight_oikkk.astype(f32), (2, 3, 4, 1, 0)).reshape(k_dim, cout)
    w2d = w2d * scale[None, :]

    # ---- build the lane-dense LHS (rows, K) ----
    x = jnp.transpose(x_ncdhw, (0, 2, 3, 4, 1)).astype(lhs_dtype)  # NDHWC
    if (kd, kh, kw) == (1, 1, 1) and (sd, sh, sw) == (1, 1, 1) \
            and (pd, ph, pw) == (0, 0, 0):
        # Fast path: the module's actual `last_cnn` usage (1x1x1, stride 1, pad 0).
        lhs = x.reshape(n * d * h * w, cin)
    else:
        # General Conv3d: lane-dense im2col patches built by XLA in the wrapper,
        # so the kernel stays a single big-K matmul (no masked in-kernel stores).
        xp = jnp.pad(x, ((0, 0), (pd, pd), (ph, ph), (pw, pw), (0, 0)))
        taps = []
        for zd in range(kd):
            for zh in range(kh):
                for zw in range(kw):
                    taps.append(jax.lax.slice(
                        xp,
                        (0, zd, zh, zw, 0),
                        (n,
                         zd + (do - 1) * sd + 1,
                         zh + (ho - 1) * sh + 1,
                         zw + (wo - 1) * sw + 1,
                         cin),
                        (1, sd, sh, sw, 1)))       # each: (N, Do, Ho, Wo, Cin)
        lhs = jnp.concatenate(taps, axis=-1).reshape(n * do * ho * wo, k_dim)

    rows = lhs.shape[0]
    lhs_itm = jnp.dtype(lhs_dtype).itemsize
    out_itm = jnp.dtype(out_dtype).itemsize

    # ---- generation-aware tiling ----
    cap = _vmem_capacity_bytes()
    k_pad = _round_up(k_dim, _LANE)

    if block_k is not None:
        tk = max(_LANE, (int(block_k) // _LANE) * _LANE)
        if k_pad % tk != 0:
            tk = _choose_block_k(k_pad, cout_p, lhs_itm, int(0.25 * cap))
    else:
        tk = _choose_block_k(k_pad, cout_p, lhs_itm, int(0.25 * cap))

    tile_budget = max(int(0.6 * cap) - 2 * tk * cout_p * lhs_itm, 1 << 20)
    if block_rows is not None:
        tm = max(_SUBLANE, _round_up(int(block_rows), _SUBLANE))
        tm = min(tm, _round_up(rows, _SUBLANE))
    else:
        tm = _choose_block_rows(rows, k_pad, cout_p, lhs_itm, out_itm, tile_budget)
    rows_p = _round_up(rows, tm)

    # ---- zero padding: rows to a tile multiple, K and Cout to 128 lanes ----
    lhs = jnp.pad(lhs, ((0, rows_p - rows), (0, k_pad - k_dim)))
    w2d = jnp.pad(w2d, ((0, k_pad - k_dim), (0, cout_p - cout))).astype(lhs_dtype)
    bias_p = jnp.pad(bias, (0, cout_p - cout)).reshape(1, cout_p)

    vmem_est = (2 * tm * k_pad * lhs_itm        # double-buffered LHS tiles
                + 2 * tk * cout_p * lhs_itm     # double-buffered weight tiles
                + 2 * tm * cout_p * out_itm     # double-buffered output tiles
                + tm * cout_p * 4               # f32 accumulator
                + cout_p * 4 + (2 << 20))
    vmem_limit = int(min(int(0.8 * cap), max(32 * 2**20, 2 * vmem_est)))

    grid = (rows_p // tm, k_pad // tk)
    out = pl.pallas_call(
        _matmul_bias_relu_kernel,
        out_shape=jax.ShapeDtypeStruct((rows_p, cout_p), out_dtype),
        grid_spec=pltpu.PrefetchScalarGridSpec(
            num_scalar_prefetch=0,
            grid=grid,
            in_specs=[
                pl.BlockSpec((tm, tk), lambda i, k: (i, k)),
                pl.BlockSpec((tk, cout_p), lambda i, k: (k, 0)),
                pl.BlockSpec((1, cout_p), lambda i, k: (0, 0)),
            ],
            out_specs=pl.BlockSpec((tm, cout_p), lambda i, k: (i, 0)),
            scratch_shapes=[pltpu.VMEM((tm, cout_p), jnp.float32)],
        ),
        compiler_params=pltpu.CompilerParams(
            dimension_semantics=("parallel", "arbitrary"),
            vmem_limit_bytes=vmem_limit),
    )(lhs, w2d, bias_p)

    # (rows_p, Cout_p) -> (N, Cout, Do, Ho, Wo); strip row/channel padding.
    out = out[:rows, :cout].reshape(n, do, ho, wo, cout)
    return jnp.transpose(out, (0, 4, 1, 2, 3))


# --------------------------------------------------------------------------- #
# Pure-JAX reference
# --------------------------------------------------------------------------- #
def _reference(x, wgt, gamma, beta, mean, var, stride, pad, eps=1e-5):
    strides = tuple(stride) if isinstance(stride, (tuple, list)) else (stride,) * 3
    pads = tuple(pad) if isinstance(pad, (tuple, list)) else (pad,) * 3
    y = jax.lax.conv_general_dilated(
        x.astype(jnp.float32), wgt.astype(jnp.float32),
        window_strides=strides,
        padding=[(p, p) for p in pads],
        dimension_numbers=("NCDHW", "OIDHW", "NCDHW"),
        precision=jax.lax.Precision.HIGHEST)
    inv_std = jax.lax.rsqrt(var.astype(jnp.float32) + eps)
    scale = (gamma * inv_std).reshape(1, -1, 1, 1, 1)
    bias = (beta - mean * gamma * inv_std).reshape(1, -1, 1, 1, 1)
    return jnp.maximum(y * scale + bias, 0.0)


if __name__ == "__main__":
    key = jax.random.PRNGKey(0)

    # --- Config 1: strided 3x3x3 reduction block; force multi-tile rows & K. ---
    N, Cin, D, H, W = 2, 8, 8, 8, 8
    Cout, K, STRIDE, PAD = 8, 3, 2, 1
    k1, k2, k3, k4, k5, k6, key = jax.random.split(key, 7)
    x = jax.random.normal(k1, (N, Cin, D, H, W), dtype=jnp.float32)
    wgt = jax.random.normal(k2, (Cout, Cin, K, K, K), dtype=jnp.float32) * 0.1
    gamma = jax.random.uniform(k3, (Cout,), dtype=jnp.float32, minval=0.5, maxval=1.5)
    beta = jax.random.normal(k4, (Cout,), dtype=jnp.float32) * 0.1
    mean = jax.random.normal(k5, (Cout,), dtype=jnp.float32) * 0.1
    var = jax.random.uniform(k6, (Cout,), dtype=jnp.float32, minval=0.5, maxval=1.5)

    out = reduction_core_block(x, wgt, gamma, beta, mean, var,
                               stride=STRIDE, pad=PAD,
                               block_rows=64, block_k=128)
    out = jax.block_until_ready(out)
    ref = _reference(x, wgt, gamma, beta, mean, var, STRIDE, PAD)
    assert out.shape == ref.shape, (out.shape, ref.shape)
    assert bool(jnp.all(out >= 0.0))
    assert bool(jnp.allclose(out, ref, rtol=5e-2, atol=5e-2)), \
        float(jnp.max(jnp.abs(out - ref)))

    # --- Config 2: the module's last_cnn usage (1x1x1, stride 1, pad 0), bf16 MXU. ---
    N2, C2, S2 = 2, 48, 4
    k1, k2, k3, k4, k5, k6, key = jax.random.split(key, 7)
    x2 = jax.random.normal(k1, (N2, C2, S2, S2, S2), dtype=jnp.float32)
    w2 = jax.random.normal(k2, (C2, C2, 1, 1, 1), dtype=jnp.float32) * 0.1
    g2 = jax.random.uniform(k3, (C2,), dtype=jnp.float32, minval=0.5, maxval=1.5)
    b2 = jax.random.normal(k4, (C2,), dtype=jnp.float32) * 0.1
    m2 = jax.random.normal(k5, (C2,), dtype=jnp.float32) * 0.1
    v2 = jax.random.uniform(k6, (C2,), dtype=jnp.float32, minval=0.5, maxval=1.5)

    out2 = reduction_core_block(x2, w2, g2, b2, m2, v2,
                                stride=(1, 1, 1), pad=(0, 0, 0),
                                compute_dtype=jnp.bfloat16)
    out2 = jax.block_until_ready(out2)
    ref2 = _reference(x2, w2, g2, b2, m2, v2, (1, 1, 1), (0, 0, 0))
    assert out2.shape == ref2.shape, (out2.shape, ref2.shape)
    assert bool(jnp.all(out2 >= 0.0))
    assert bool(jnp.allclose(out2, ref2, rtol=5e-2, atol=5e-2)), \
        float(jnp.max(jnp.abs(out2 - ref2)))

    print("KERNEL_OK")
</pallas_src>

<mosaic_0001>
module attributes {stable_mosaic.version = 11 : i64} {
  func.func @_matmul_bias_relu_kernel(%arg0: i32, %arg1: i32, %arg2: memref<64x128xf32, #tpu.memory_space<vmem>>, %arg3: memref<128x128xf32, #tpu.memory_space<vmem>>, %arg4: memref<1x128xf32, #tpu.memory_space<vmem>>, %arg5: memref<64x128xf32, #tpu.memory_space<vmem>>, %arg6: memref<64x128xf32, #tpu.memory_space<vmem>>) attributes {dimension_semantics = [#tpu.dimension_semantics<parallel>, #tpu.dimension_semantics<arbitrary>], iteration_bounds = array<i64: 2, 2>, scalar_prefetch = 0 : i64, scratch_operands = 1 : i64, tpu.core_type = #tpu.core_type<tc>, window_params = [{transform_indices = @transform_0, window_bounds = array<i64: 64, 128>}, {transform_indices = @transform_1, window_bounds = array<i64: 128, 128>}, {pipeline_mode = #tpu.pipeline_mode<synchronous>, transform_indices = @transform_2, window_bounds = array<i64: 1, 128>}, {transform_indices = @transform_3, window_bounds = array<i64: 64, 128>}]} {
    %c0_i32 = arith.constant 0 : i32
    %0 = arith.cmpi eq, %arg1, %c0_i32 : i32
    %1 = arith.extui %0 : i1 to i32
    %c0_i32_0 = arith.constant 0 : i32
    %2 = arith.cmpi ne, %1, %c0_i32_0 : i32
    scf.if %2 {
      %cst_9 = arith.constant 0.000000e+00 : f32
      %12 = vector.broadcast %cst_9 : f32 to vector<64x128xf32>
      %c0_10 = arith.constant 0 : index
      %c0_11 = arith.constant 0 : index
      %13 = vector.load %arg6[%c0_10, %c0_11] : memref<64x128xf32, #tpu.memory_space<vmem>>, vector<64x128xf32>
      tpu.vector_store %arg6[%c0_10, %c0_11], %12 {strides = array<i32>} : memref<64x128xf32, #tpu.memory_space<vmem>>, vector<64x128xf32>,
    } else {
    }
    %c0 = arith.constant 0 : index
    %c0_1 = arith.constant 0 : index
    %3 = vector.load %arg6[%c0, %c0_1] : memref<64x128xf32, #tpu.memory_space<vmem>>, vector<64x128xf32>
    %c0_2 = arith.constant 0 : index
    %c0_3 = arith.constant 0 : index
    %4 = vector.load %arg2[%c0_2, %c0_3] : memref<64x128xf32, #tpu.memory_space<vmem>>, vector<64x128xf32>
    %c0_4 = arith.constant 0 : index
    %c0_5 = arith.constant 0 : index
    %5 = vector.load %arg3[%c0_4, %c0_5] : memref<128x128xf32, #tpu.memory_space<vmem>>, vector<128x128xf32>
    %cst = arith.constant dense<0.000000e+00> : vector<64x128xf32>
    %6 = tpu.matmul %4, %5, %cst {dimension_numbers = #tpu.dot_dimension_numbers<[1], [0], [0], [1], [0, 0, 1, 1], [], []>} : vector<64x128xf32>, vector<128x128xf32>, vector<64x128xf32> -> vector<64x128xf32>
    %7 = arith.addf %3, %6 : vector<64x128xf32>
    %c0_6 = arith.constant 0 : index
    %c0_7 = arith.constant 0 : index
    %8 = vector.load %arg6[%c0_6, %c0_7] : memref<64x128xf32, #tpu.memory_space<vmem>>, vector<64x128xf32>
    tpu.vector_store %arg6[%c0_6, %c0_7], %7 {strides = array<i32>} : memref<64x128xf32, #tpu.memory_space<vmem>>, vector<64x128xf32>,
    %c1_i32 = arith.constant 1 : i32
    %9 = arith.cmpi eq, %arg1, %c1_i32 : i32
    %10 = arith.extui %9 : i1 to i32
    %c0_i32_8 = arith.constant 0 : i32
    %11 = arith.cmpi ne, %10, %c0_i32_8 : i32
    scf.if %11 {
      %c0_9 = arith.constant 0 : index
      %c0_10 = arith.constant 0 : index
      %12 = vector.load %arg6[%c0_9, %c0_10] : memref<64x128xf32, #tpu.memory_space<vmem>>, vector<64x128xf32>
      %c0_11 = arith.constant 0 : index
      %c0_12 = arith.constant 0 : index
      %13 = vector.load %arg4[%c0_11, %c0_12] : memref<1x128xf32, #tpu.memory_space<vmem>>, vector<1x128xf32>
      %14 = vector.broadcast %13 : vector<1x128xf32> to vector<64x128xf32>
      %15 = arith.addf %12, %14 : vector<64x128xf32>
      %cst_13 = arith.constant 0.000000e+00 : f32
      %16 = vector.broadcast %cst_13 : f32 to vector<64x128xf32>
      %17 = arith.maximumf %15, %16 : vector<64x128xf32>
      %c0_14 = arith.constant 0 : index
      %c0_15 = arith.constant 0 : index
      %18 = vector.load %arg5[%c0_14, %c0_15] : memref<64x128xf32, #tpu.memory_space<vmem>>, vector<64x128xf32>
      tpu.vector_store %arg5[%c0_14, %c0_15], %17 {strides = array<i32>} : memref<64x128xf32, #tpu.memory_space<vmem>>, vector<64x128xf32>,
    } else {
    }
    return
  }
  func.func @transform_0(%arg0: i32, %arg1: i32) -> (i32, i32) {
    %c0_i32 = arith.constant 0 : i32
    return %arg0, %arg1 : i32, i32
  }
  func.func @transform_1(%arg0: i32, %arg1: i32) -> (i32, i32) {
    %c0_i32 = arith.constant 0 : i32
    %c0_i32_0 = arith.constant 0 : i32
    return %arg1, %c0_i32 : i32, i32
  }
  func.func @transform_2(%arg0: i32, %arg1: i32) -> (i32, i32) {
    %c0_i32 = arith.constant 0 : i32
    %c0_i32_0 = arith.constant 0 : i32
    %c0_i32_1 = arith.constant 0 : i32
    return %c0_i32, %c0_i32_0 : i32, i32
  }
  func.func @transform_3(%arg0: i32, %arg1: i32) -> (i32, i32) {
    %c0_i32 = arith.constant 0 : i32
    %c0_i32_0 = arith.constant 0 : i32
    return %arg0, %c0_i32 : i32, i32
  }
}

</mosaic_0001>

<llo_original>
// kernel: tpu_custom_call.1
$region0: #{tpu_custom_call.1}
  #allocation0 [shape = 'u32[]', space=smem, size = 0x4, offset = 0x4, fixed_abs, tag = 'smem constant byte address 0x4 - core index']
  #allocation1 [shape = 'u32[144,128]{1,0:T(1,128)}', space=vmem, size = 0x12000, scoped, tag = 'internal scratch']
  #allocation2 [shape = 'f32[64,128]{1,0:T(8,128)}', space=vmem, size = 0x8000, scoped, tag = 'scratch operand']
  %s0 = inlined_call_operand.hbm [shape: f32[128,256], index: 0, kind: input, shape index: {}]
  %s1 = inlined_call_operand.hbm [shape: f32[256,128], index: 1, kind: input, shape index: {}]
  %s2 = inlined_call_operand.vmem [shape: f32[1,128], index: 2, kind: input, shape index: {}]
  %s3 = inlined_call_operand.hbm [shape: f32[128,128], index: 3, kind: output, shape index: {}]
  %s4 = sld [smem:[#allocation0]]
  $region61: #{tpu_custom_call.1} parent=0
    _
  %s6 = ssub.s32 1, %s4
  %s7 = scalar_select 0, %s6, %s4
  $region1: #{tpu_custom_call.1} parent=0
    #allocation3 [shape = 'u8[65536]{0}', space=vmem, size = 0x10000, scoped, tag = 'input window, operand 0']
    #allocation4 [shape = 's32[2]{0}', space=sflag, size = 0x8, scoped, tag = 'scoped memory for tpu_custom_call.1']
    #allocation5 [shape = 's32[2]{0}', space=sflag, size = 0x8, scoped, tag = 'scoped memory for tpu_custom_call.1']
    #allocation6 [shape = 'u8[131072]{0}', space=vmem, size = 0x20000, scoped, tag = 'input window, operand 1']
    #allocation7 [shape = 's32[2]{0}', space=sflag, size = 0x8, scoped, tag = 'scoped memory for tpu_custom_call.1']
    #allocation8 [shape = 'u8[65536]{0}', space=vmem, size = 0x10000, scoped, tag = 'output window, operand 0']
    %8 = vsyncpa [#allocation4], 0
    %s9 = scalar_lea.sflag [#allocation4], 1
    %10 = vsyncpa %s9, 0
    %11 = vsyncpa [#allocation7], 0
    %s12 = scalar_lea.sflag [#allocation7], 1
    %13 = vsyncpa %s12, 0
    %14 = vsyncpa [#allocation5], 0
    %s15 = scalar_lea.sflag [#allocation5], 1
    %16 = vsyncpa %s15, 0
    loop: start=0, step=1, limit=6
    $region2: #{tpu_custom_call.1} parent=1 // loop_pre_header
      _
    $region3: #{tpu_custom_call.1} parent=1 // loop_header
      %s18 = sphi 0, %s22
      %p19 = scmp.ge.s32.totalorder %s18, 6
      %s25 = sphi 0, %s37
      %s26 = sphi 0, %s33
      %s27 = sphi 0, %s25
      %s28 = sphi 0, %s26
      %s29 = sphi 0, %s27
      %s30 = sphi 0, %s28
      %s42 = sphi 0, %s44
      %s45 = sphi 0, %s42
      %s46 = sphi 0, %s45
      %s62 = sphi 0, %s46
      %s68 = sphi 0, %s70
      %s71 = sphi 0, %s68
      %s72 = sphi 0, %s71
      %s88 = sphi 0, %s72
      %s92 = sphi 0, %s92
      %s94 = sphi 0, %s92
      %s95 = sphi 0, %s94
      %s109 = sphi 0, %s95
      %s115 = sphi 0, %s117
      %s118 = sphi 0, %s115
      %s119 = sphi 0, %s118
      %s135 = sphi 0, %s119
    $region4: #{tpu_custom_call.1} parent=1 // loop_header_branch
      %21 = sbr.rel (%p19) target = $region8
    $region5: #{tpu_custom_call.1} parent=1 // loop_body
      %s23 = ssub.s32 %s18, 1
      %s24 = ssub.s32 %s18, 2
      %s31 = sadd.s32 1, %s26
      %p32 = scmp.ge.s32.totalorder %s31, 2
      %s33 = scalar_select %p32, 0, %s31
      %s34 = sadd.s32 1, %s25
      %s35 = scalar_select %p32, %s34, %s25
      %p36 = scmp.ge.s32.totalorder %s35, 2
      %s37 = scalar_select %p36, 0, %s35
      %s38 = ssub.s32 %s25, %s37
      %s39 = ssub.s32 %s26, %s33
      %s40 = sor.u32 %s38, %s39
      %p41 = scmp.eq.s32.totalorder %s40, 0
      %s43 = sadd.s32 %s42, 1
      %s44 = scalar_select %p41, %s42, %s43
      %p47 = pneg %p41
      %p48 = scmp.eq.s32.totalorder %s18, 3
      %p49 = por %p47, %p48
      %p50 = scmp.ne.s32.totalorder %s42, %s45
      %p51 = scmp.eq.s32.totalorder %s18, 0
      %p52 = por %p50, %p51
      %p53 = scmp.ne.s32.totalorder %s42, %s45
      %p54 = scmp.eq.s32.totalorder %s23, 3
      %p55 = por %p53, %p54
      %p56 = scmp.ne.s32.totalorder %s45, %s46
      %p57 = scmp.eq.s32.totalorder %s23, 0
      %p58 = por %p56, %p57
      %p59 = scmp.ne.s32.totalorder %s45, %s46
      %p60 = scmp.eq.s32.totalorder %s24, 3
      %p61 = por %p59, %p60
      %p63 = scmp.ne.s32.totalorder %s46, %s62
      %p64 = scmp.eq.s32.totalorder %s24, 0
      %p65 = por %p63, %p64
      %s66 = ssub.s32 %s26, %s33
      %p67 = scmp.eq.s32.totalorder %s66, 0
      %s69 = sadd.s32 %s68, 1
      %s70 = scalar_select %p67, %s68, %s69
      %p73 = pneg %p67
      %p74 = scmp.eq.s32.totalorder %s18, 3
      %p75 = por %p73, %p74
      %p76 = scmp.ne.s32.totalorder %s68, %s71
      %p77 = scmp.eq.s32.totalorder %s18, 0
      %p78 = por %p76, %p77
      %p79 = scmp.ne.s32.totalorder %s68, %s71
      %p80 = scmp.eq.s32.totalorder %s23, 3
      %p81 = por %p79, %p80
      %p82 = scmp.ne.s32.totalorder %s71, %s72
      %p83 = scmp.eq.s32.totalorder %s23, 0
      %p84 = por %p82, %p83
      %p85 = scmp.ne.s32.totalorder %s71, %s72
      %p86 = scmp.eq.s32.totalorder %s24, 3
      %p87 = por %p85, %p86
      %p89 = scmp.ne.s32.totalorder %s72, %s88
      %p90 = scmp.eq.s32.totalorder %s24, 0
      %p91 = por %p89, %p90
      %s93 = sadd.s32 %s92, 1
      %p96 = scmp.eq.s32.totalorder %s18, 3
      %p97 = scmp.ne.s32.totalorder %s92, %s94
      %p98 = scmp.eq.s32.totalorder %s18, 0
      %p99 = por %p97, %p98
      %p100 = scmp.ne.s32.totalorder %s92, %s94
      %p101 = scmp.eq.s32.totalorder %s23, 3
      %p102 = por %p100, %p101
      %p103 = scmp.ne.s32.totalorder %s94, %s95
      %p104 = scmp.eq.s32.totalorder %s23, 0
      %p105 = por %p103, %p104
      %p106 = scmp.ne.s32.totalorder %s94, %s95
      %p107 = scmp.eq.s32.totalorder %s24, 3
      %p108 = por %p106, %p107
      %p110 = scmp.ne.s32.totalorder %s95, %s109
      %p111 = scmp.eq.s32.totalorder %s24, 0
      %p112 = por %p110, %p111
      %s113 = ssub.s32 %s25, %s37
      %p114 = scmp.eq.s32.totalorder %s113, 0
      %s116 = sadd.s32 %s115, 1
      %s117 = scalar_select %p114, %s115, %s116
      %p120 = pneg %p114
      %p121 = scmp.eq.s32.totalorder %s18, 3
      %p122 = por %p120, %p121
      %p123 = scmp.ne.s32.totalorder %s115, %s118
      %p124 = scmp.eq.s32.totalorder %s18, 0
      %p125 = por %p123, %p124
      %p126 = scmp.ne.s32.totalorder %s115, %s118
      %p127 = scmp.eq.s32.totalorder %s23, 3
      %p128 = por %p126, %p127
      %p129 = scmp.ne.s32.totalorder %s118, %s119
      %p130 = scmp.eq.s32.totalorder %s23, 0
      %p131 = por %p129, %p130
      %p132 = scmp.ne.s32.totalorder %s118, %s119
      %p133 = scmp.eq.s32.totalorder %s24, 3
      %p134 = por %p132, %p133
      %p136 = scmp.ne.s32.totalorder %s119, %s135
      %p137 = scmp.eq.s32.totalorder %s24, 0
      %p138 = por %p136, %p137
      %p139 = scmp.le.s32.totalorder 1, %s18
      %p140 = scmp.lt.s32.totalorder %s18, 5
      %p141 = pnand %p139, %p140
      %p142 = pneg %p141
      // Predicated region
      $region9: #{tpu_custom_call.1} parent=5 // pred_check
        _
      $region10: #{tpu_custom_call.1} parent=5 // pred_check_branch
        %144 = sbr.rel (%p141) target = $region12
      $region11: #{tpu_custom_call.1} parent=5 // pred_region
        %s145 = ssub.s32 %s18, 1
        // Predicated region
        $region13: #{tpu_custom_call.1} parent=11 // pred_check
          %p146 = pneg %p105
        $region14: #{tpu_custom_call.1} parent=11 // pred_check_branch
          %148 = sbr.rel (%p146) target = $region16
        $region15: #{tpu_custom_call.1} parent=11 // pred_region
          _
        $region16: #{tpu_custom_call.1} parent=11 // pred_fallthru
          _
      $region12: #{tpu_custom_call.1} parent=5 // pred_fallthru
        _
      %p149 = scmp.lt.s32.totalorder %s18, 4
      // Predicated region
      $region17: #{tpu_custom_call.1} parent=5 // pred_check
        %p150 = pneg %p149
      $region18: #{tpu_custom_call.1} parent=5 // pred_check_branch
        %152 = sbr.rel (%p150) target = $region20
      $region19: #{tpu_custom_call.1} parent=5 // pred_region
        // Predicated region
        $region21: #{tpu_custom_call.1} parent=19 // pred_check
          %p153 = pneg %p52
        $region22: #{tpu_custom_call.1} parent=19 // pred_check_branch
          %155 = sbr.rel (%p153) target = $region24
        $region23: #{tpu_custom_call.1} parent=19 // pred_region
          %s156 = sand.u32 %s42, 1
          %s157 = scalar_lea.sflag [#allocation4], %s156
          %s158 = sand.u32 %s42, 1
          %s159 = smul.addr %s158, 64
          %s160 = scalar_lea.vmem [#allocation3], %s159
          %s161 = smul.u32 8, %s25
          %s163 = ssub.s32 1024, 1024
          %164 = vsyncadd %s157, %s163
          %s165 = smul.addr %s161, 2
          %s166 = sadd.s32 %s26, %s165
          %s167 = smul.addr %s166, 128
          %s168 = scalar_lea.hbm %s0, %s167
          %s169 = sshll.u32 %s160, 4
          %s170 = int_to_ptr.vmem [resolvable:$true] %s169
          %175 = dma.hbm_to_vmem [thread:$0]  %s168, 1024, %s170, %s157, 256, 128, 8
        $region24: #{tpu_custom_call.1} parent=19 // pred_fallthru
          _
        // Predicated region
        $region25: #{tpu_custom_call.1} parent=19 // pred_check
          %p176 = pneg %p78
        $region26: #{tpu_custom_call.1} parent=19 // pred_check_branch
          %178 = sbr.rel (%p176) target = $region28
        $region27: #{tpu_custom_call.1} parent=19 // pred_region
          %s179 = sand.u32 %s68, 1
          %s180 = scalar_lea.sflag [#allocation7], %s179
          %s181 = sand.u32 %s68, 1
          %s182 = smul.addr %s181, 128
          %s183 = scalar_lea.vmem [#allocation6], %s182
          %s184 = smul.u32 16, %s26
          %s186 = ssub.s32 2048, 2048
          %187 = vsyncadd %s180, %s186
          %s188 = smul.addr %s184, 128
          %s189 = scalar_lea.hbm %s1, %s188
          %s190 = sshll.u32 %s183, 4
          %s191 = int_to_ptr.vmem [resolvable:$true] %s190
          %196 = dma.hbm_to_vmem [thread:$0]  %s189, 2048, %s191, %s180, 128, 128, 8
        $region28: #{tpu_custom_call.1} parent=19 // pred_fallthru
          _
      $region20: #{tpu_custom_call.1} parent=5 // pred_fallthru
        _
      %p197 = scmp.le.s32.totalorder 1, %s18
      %p198 = scmp.lt.s32.totalorder %s18, 5
      %p199 = pnand %p197, %p198
      %p200 = pneg %p199
      // Predicated region
      $region29: #{tpu_custom_call.1} parent=5 // pred_check
        _
      $region30: #{tpu_custom_call.1} parent=5 // pred_check_branch
        %202 = sbr.rel (%p199) target = $region32
      $region31: #{tpu_custom_call.1} parent=5 // pred_region
        %s203 = ssub.s32 %s18, 1
        %s204 = sand.u32 %s45, 1
        %s205 = scalar_lea.sflag [#allocation4], %s204
        %s206 = sand.u32 %s45, 1
        %s207 = smul.addr %s206, 64
        %s208 = scalar_lea.vmem [#allocation3], %s207
        // Predicated region
        $region33: #{tpu_custom_call.1} parent=31 // pred_check
          %p209 = pneg %p58
        $region34: #{tpu_custom_call.1} parent=31 // pred_check_branch
          %211 = sbr.rel (%p209) target = $region36
        $region35: #{tpu_custom_call.1} parent=31 // pred_region
          %212 = dma.done %s205, 1024
        $region36: #{tpu_custom_call.1} parent=31 // pred_fallthru
          _
        %s213 = sand.u32 %s71, 1
        %s214 = scalar_lea.sflag [#allocation7], %s213
        %s215 = sand.u32 %s71, 1
        %s216 = smul.addr %s215, 128
        %s217 = scalar_lea.vmem [#allocation6], %s216
        // Predicated region
        $region37: #{tpu_custom_call.1} parent=31 // pred_check
          %p218 = pneg %p84
        $region38: #{tpu_custom_call.1} parent=31 // pred_check_branch
          %220 = sbr.rel (%p218) target = $region40
        $region39: #{tpu_custom_call.1} parent=31 // pred_region
          %221 = dma.done %s214, 2048
        $region40: #{tpu_custom_call.1} parent=31 // pred_fallthru
          _
        %s222 = sand.u32 %s45, 1
        %s223 = scalar_lea.sflag [#allocation4], %s222
        %s224 = sand.u32 %s45, 1
        %s225 = smul.addr %s224, 64
        %s226 = scalar_lea.vmem [#allocation3], %s225
        %p227 = pneg %p58
        %p228 = pneg %p55
        %s229 = sand.u32 %s71, 1
        %s230 = scalar_lea.sflag [#allocation7], %s229
        %s231 = sand.u32 %s71, 1
        %s232 = smul.addr %s231, 128
        %s233 = scalar_lea.vmem [#allocation6], %s232
        %p234 = pneg %p84
        %p235 = pneg %p81
        %p236 = pneg %p105
        %p237 = pneg %p102
        %p238 = pneg %p131
        %p239 = pneg %p128
        %s240 = sand.u32 %s118, 1
        %s241 = scalar_lea.sflag [#allocation5], %s240
        %s242 = sand.u32 %s118, 1
        %s243 = smul.addr %s242, 64
        %s244 = scalar_lea.vmem [#allocation8], %s243
        %s245 = smul.u32 8, %s27
        %s246 = smul.u32 16, %s28
        %s247 = smul.u32 8, %s27
        %p248 = scmp.eq.s32.totalorder %s28, 0
        // Predicated region
        $region41: #{tpu_custom_call.1} parent=31 // pred_check
          %p249 = pneg %p248
        $region42: #{tpu_custom_call.1} parent=31 // pred_check_branch
          %251 = sbr.rel (%p249) target = $region44
        $region43: #{tpu_custom_call.1} parent=31 // pred_region
          %252 = vst [vmem:[#allocation2] sm:$0xff] 0.0
          %253 = vst [vmem:[#allocation2 + $0x8] sm:$0xff] 0.0
          %254 = vst [vmem:[#allocation2 + $0x10] sm:$0xff] 0.0
          %255 = vst [vmem:[#allocation2 + $0x18] sm:$0xff] 0.0
          %256 = vst [vmem:[#allocation2 + $0x20] sm:$0xff] 0.0
          %257 = vst [vmem:[#allocation2 + $0x28] sm:$0xff] 0.0
          %258 = vst [vmem:[#allocation2 + $0x30] sm:$0xff] 0.0
          %259 = vst [vmem:[#allocation2 + $0x38] sm:$0xff] 0.0
        $region44: #{tpu_custom_call.1} parent=31 // pred_fallthru
          _
        %v260 = vld [vmem:[#allocation2] sm:$0xff]
        %v261 = vld [vmem:[#allocation2 + $0x8] sm:$0xff]
        %v262 = vld [vmem:[#allocation2 + $0x10] sm:$0xff]
        %v263 = vld [vmem:[#allocation2 + $0x18] sm:$0xff]
        %v264 = vld [vmem:[#allocation2 + $0x20] sm:$0xff]
        %v265 = vld [vmem:[#allocation2 + $0x28] sm:$0xff]
        %v266 = vld [vmem:[#allocation2 + $0x30] sm:$0xff]
        %v267 = vld [vmem:[#allocation2 + $0x38] sm:$0xff]
        %v268 = vld [vmem:[%s208] sm:$0xff]
        %v269 = vld [vmem:[%s208 + $0x8] sm:$0xff]
        %v270 = vld [vmem:[%s208 + $0x10] sm:$0xff]
        %v271 = vld [vmem:[%s208 + $0x18] sm:$0xff]
        %v272 = vld [vmem:[%s208 + $0x20] sm:$0xff]
        %v273 = vld [vmem:[%s208 + $0x28] sm:$0xff]
        %v274 = vld [vmem:[%s208 + $0x30] sm:$0xff]
        %v275 = vld [vmem:[%s208 + $0x38] sm:$0xff]
        %v276 = vld [vmem:[%s217] sm:$0xff]
        %v277 = vld [vmem:[%s217 + $0x8] sm:$0xff]
        %v278 = vld [vmem:[%s217 + $0x10] sm:$0xff]
        %v279 = vld [vmem:[%s217 + $0x18] sm:$0xff]
        %v280 = vld [vmem:[%s217 + $0x20] sm:$0xff]
        %v281 = vld [vmem:[%s217 + $0x28] sm:$0xff]
        %v282 = vld [vmem:[%s217 + $0x30] sm:$0xff]
        %v283 = vld [vmem:[%s217 + $0x38] sm:$0xff]
        %v284 = vld [vmem:[%s217 + $0x40] sm:$0xff]
        %v285 = vld [vmem:[%s217 + $0x48] sm:$0xff]
        %v286 = vld [vmem:[%s217 + $0x50] sm:$0xff]
        %v287 = vld [vmem:[%s217 + $0x58] sm:$0xff]
        %v288 = vld [vmem:[%s217 + $0x60] sm:$0xff]
        %v289 = vld [vmem:[%s217 + $0x68] sm:$0xff]
        %v290 = vld [vmem:[%s217 + $0x70] sm:$0xff]
        %v291 = vld [vmem:[%s217 + $0x78] sm:$0xff]
        %292 = vmatprep.subr.mxu0 0.0
        %293 = vmatpush1.msra.mxu0 %v276
        %294 = vmatprep.subr.mxu0 0.0
        %295 = vmatpush1.msra.mxu0 %v277
        %296 = vmatprep.subr.mxu0 0.0
        %297 = vmatpush1.msra.mxu0 %v278
        %298 = vmatprep.subr.mxu0 0.0
        %299 = vmatpush1.msra.mxu0 %v279
        %300 = vmatprep.subr.mxu0 0.0
        %301 = vmatpush1.msra.mxu0 %v280
        %302 = vmatprep.subr.mxu0 0.0
        %303 = vmatpush1.msra.mxu0 %v281
        %304 = vmatprep.subr.mxu0 0.0
        %305 = vmatpush1.msra.mxu0 %v282
        %306 = vmatprep.subr.mxu0 0.0
        %307 = vmatpush1.msra.mxu0 %v283
        %308 = vmatprep.subr.mxu0 0.0
        %309 = vmatpush1.msra.mxu0 %v284
        %310 = vmatprep.subr.mxu0 0.0
        %311 = vmatpush1.msra.mxu0 %v285
        %312 = vmatprep.subr.mxu0 0.0
        %313 = vmatpush1.msra.mxu0 %v286
        %314 = vmatprep.subr.mxu0 0.0
        %315 = vmatpush1.msra.mxu0 %v287
        %316 = vmatprep.subr.mxu0 0.0
        %317 = vmatpush1.msra.mxu0 %v288
        %318 = vmatprep.subr.mxu0 0.0
        %319 = vmatpush1.msra.mxu0 %v289
        %320 = vmatprep.subr.mxu0 0.0
        %321 = vmatpush1.msra.mxu0 %v290
        %322 = vmatprep.subr.mxu0 0.0
        %323 = vmatpush1.msra.mxu0 %v291
        %324 = vmatprep.subr.mxu0 0.0
        %325 = vmatpush1.msra.mxu0 0.0
        %326 = vmatprep.subr.mxu0 0.0
        %327 = vmatpush1.msra.mxu0 0.0
        %328 = vmatprep.subr.mxu0 0.0
        %329 = vmatpush1.msra.mxu0 0.0
        %330 = vmatprep.subr.mxu0 0.0
        %331 = vmatpush1.msra.mxu0 0.0
        %332 = vmatprep.subr.mxu0 0.0
        %333 = vmatpush1.msra.mxu0 0.0
        %334 = vmatprep.subr.mxu0 0.0
        %335 = vmatpush1.msra.mxu0 0.0
        %336 = vmatprep.subr.mxu0 0.0
        %337 = vmatpush1.msra.mxu0 0.0
        %338 = vmatprep.subr.mxu0 0.0
        %339 = vmatpush1.msra.mxu0 0.0
        %340 = vmatprep.subr.mxu0 0.0
        %341 = vmatpush1.msra.mxu0 0.0
        %342 = vmatprep.subr.mxu0 0.0
        %343 = vmatpush1.msra.mxu0 0.0
        %344 = vmatprep.subr.mxu0 0.0
        %345 = vmatpush1.msra.mxu0 0.0
        %346 = vmatprep.subr.mxu0 0.0
        %347 = vmatpush1.msra.mxu0 0.0
        %348 = vmatprep.subr.mxu0 0.0
        %349 = vmatpush1.msra.mxu0 0.0
        %350 = vmatprep.subr.mxu0 0.0
        %351 = vmatpush1.msra.mxu0 0.0
        %352 = vmatprep.subr.mxu0 0.0
        %353 = vmatpush1.msra.mxu0 0.0
        %354 = vmatprep.subr.mxu0 0.0
        %355 = vmatpush1.msra.mxu0 0.0
        %356 = vmatprep.mubr.f32.mxu0 0.0
        %357 = vmatmul.mubr.f32.gmra.mrb[0].mxu0 %v268
        %v358 = vpop.f32.mrb[0].mxu0
        %v359 = vadd.f32 0.0, %v358
        %v360 = vpop.f32.mrb[0].mxu0
        %361 = vmatprep.mubr.f32.mxu0 0.0
        %362 = vmatmul.mubr.f32.gmra.mrb[0].mxu0 %v269
        %v363 = vpop.f32.mrb[0].mxu0
        %v364 = vadd.f32 0.0, %v363
        %v365 = vpop.f32.mrb[0].mxu0
        %366 = vmatprep.mubr.f32.mxu0 0.0
        %367 = vmatmul.mubr.f32.gmra.mrb[0].mxu0 %v270
        %v368 = vpop.f32.mrb[0].mxu0
        %v369 = vadd.f32 0.0, %v368
        %v370 = vpop.f32.mrb[0].mxu0
        %371 = vmatprep.mubr.f32.mxu0 0.0
        %372 = vmatmul.mubr.f32.gmra.mrb[0].mxu0 %v271
        %v373 = vpop.f32.mrb[0].mxu0
        %v374 = vadd.f32 0.0, %v373
        %v375 = vpop.f32.mrb[0].mxu0
        %376 = vmatprep.mubr.f32.mxu0 0.0
        %377 = vmatmul.mubr.f32.gmra.mrb[0].mxu0 %v272
        %v378 = vpop.f32.mrb[0].mxu0
        %v379 = vadd.f32 0.0, %v378
        %v380 = vpop.f32.mrb[0].mxu0
        %381 = vmatprep.mubr.f32.mxu0 0.0
        %382 = vmatmul.mubr.f32.gmra.mrb[0].mxu0 %v273
        %v383 = vpop.f32.mrb[0].mxu0
        %v384 = vadd.f32 0.0, %v383
        %v385 = vpop.f32.mrb[0].mxu0
        %386 = vmatprep.mubr.f32.mxu0 0.0
        %387 = vmatmul.mubr.f32.gmra.mrb[0].mxu0 %v274
        %v388 = vpop.f32.mrb[0].mxu0
        %v389 = vadd.f32 0.0, %v388
        %v390 = vpop.f32.mrb[0].mxu0
        %391 = vmatprep.mubr.f32.mxu0 0.0
        %392 = vmatmul.mubr.f32.gmra.mrb[0].mxu0 %v275
        %v393 = vpop.f32.mrb[0].mxu0
        %v394 = vadd.f32 0.0, %v393
        %v395 = vpop.f32.mrb[0].mxu0
        %396 = vdwg.mxu0
        %v397 = vadd.f32 %v260, %v359
        %v398 = vadd.f32 %v261, %v364
        %v399 = vadd.f32 %v262, %v369
        %v400 = vadd.f32 %v263, %v374
        %v401 = vadd.f32 %v264, %v379
        %v402 = vadd.f32 %v265, %v384
        %v403 = vadd.f32 %v266, %v389
        %v404 = vadd.f32 %v267, %v394
        %405 = vst [vmem:[#allocation2] sm:$0xff] %v397
        %406 = vst [vmem:[#allocation2 + $0x8] sm:$0xff] %v398
        %407 = vst [vmem:[#allocation2 + $0x10] sm:$0xff] %v399
        %408 = vst [vmem:[#allocation2 + $0x18] sm:$0xff] %v400
        %409 = vst [vmem:[#allocation2 + $0x20] sm:$0xff] %v401
        %410 = vst [vmem:[#allocation2 + $0x28] sm:$0xff] %v402
        %411 = vst [vmem:[#allocation2 + $0x30] sm:$0xff] %v403
        %412 = vst [vmem:[#allocation2 + $0x38] sm:$0xff] %v404
        %p413 = scmp.eq.s32.totalorder %s28, 1
        // Predicated region
        $region45: #{tpu_custom_call.1} parent=31 // pred_check
          %p414 = pneg %p413
        $region46: #{tpu_custom_call.1} parent=31 // pred_check_branch
          %416 = sbr.rel (%p414) target = $region48
        $region47: #{tpu_custom_call.1} parent=31 // pred_region
          %v417 = vld [vmem:[#allocation2] sm:$0xff]
          %v418 = vld [vmem:[#allocation2 + $0x8] sm:$0xff]
          %v419 = vld [vmem:[#allocation2 + $0x10] sm:$0xff]
          %v420 = vld [vmem:[#allocation2 + $0x18] sm:$0xff]
          %v421 = vld [vmem:[#allocation2 + $0x20] sm:$0xff]
          %v422 = vld [vmem:[#allocation2 + $0x28] sm:$0xff]
          %v423 = vld [vmem:[#allocation2 + $0x30] sm:$0xff]
          %v424 = vld [vmem:[#allocation2 + $0x38] sm:$0xff]
          %v425 = vld [vmem:[%s2] sm:$0x1]
          %v427 = vlaneseq
          %v428 = vshrl.u32 %v427, 7
          %v429 = vsub.s32 0, %v428
          %v430 = vrot.slane %v425, %v429
          %v432 = vadd.f32 %v417, %v430
          %v433 = vadd.f32 %v418, %v430
          %v434 = vadd.f32 %v419, %v430
          %v435 = vadd.f32 %v420, %v430
          %v436 = vadd.f32 %v421, %v430
          %v437 = vadd.f32 %v422, %v430
          %v438 = vadd.f32 %v423, %v430
          %v439 = vadd.f32 %v424, %v430
          %v440 = vmax.f32 %v432, 0.0
          %v441 = vmax.f32 %v433, 0.0
          %v442 = vmax.f32 %v434, 0.0
          %v443 = vmax.f32 %v435, 0.0
          %v444 = vmax.f32 %v436, 0.0
          %v445 = vmax.f32 %v437, 0.0
          %v446 = vmax.f32 %v438, 0.0
          %v447 = vmax.f32 %v439, 0.0
          %448 = vst [vmem:[%s244] sm:$0xff] %v440
          %449 = vst [vmem:[%s244 + $0x8] sm:$0xff] %v441
          %450 = vst [vmem:[%s244 + $0x10] sm:$0xff] %v442
          %451 = vst [vmem:[%s244 + $0x18] sm:$0xff] %v443
          %452 = vst [vmem:[%s244 + $0x20] sm:$0xff] %v444
          %453 = vst [vmem:[%s244 + $0x28] sm:$0xff] %v445
          %454 = vst [vmem:[%s244 + $0x30] sm:$0xff] %v446
          %455 = vst [vmem:[%s244 + $0x38] sm:$0xff] %v447
        $region48: #{tpu_custom_call.1} parent=31 // pred_fallthru
          _
        %s456 = sand.u32 %s118, 1
        %s457 = scalar_lea.sflag [#allocation5], %s456
        %s458 = sand.u32 %s118, 1
        %s459 = smul.addr %s458, 64
        %s460 = scalar_lea.vmem [#allocation8], %s459
        // Predicated region
        $region49: #{tpu_custom_call.1} parent=31 // pred_check
          %p461 = pneg %p128
        $region50: #{tpu_custom_call.1} parent=31 // pred_check_branch
          %463 = sbr.rel (%p461) target = $region52
        $region51: #{tpu_custom_call.1} parent=31 // pred_region
          %s464 = smul.u32 8, %s27
          %s466 = ssub.s32 1024, 1024
          %467 = vsyncadd %s457, %s466
          %s468 = smul.addr %s464, 128
          %s469 = scalar_lea.hbm %s3, %s468
          %s470 = sshll.u32 %s460, 4
          %s471 = int_to_ptr.vmem [resolvable:$true] %s470
          %476 = dma.vmem_to_hbm [thread:$0]  %s471, 1024, %s469, %s457, 128, 128, 8
        $region52: #{tpu_custom_call.1} parent=31 // pred_fallthru
          _
      $region32: #{tpu_custom_call.1} parent=5 // pred_fallthru
        _
      %p477 = scmp.le.s32.totalorder 2, %s18
      // Predicated region
      $region53: #{tpu_custom_call.1} parent=5 // pred_check
        %p478 = pneg %p477
      $region54: #{tpu_custom_call.1} parent=5 // pred_check_branch
        %480 = sbr.rel (%p478) target = $region56
      $region55: #{tpu_custom_call.1} parent=5 // pred_region
        %s481 = ssub.s32 %s18, 2
        // Predicated region
        $region57: #{tpu_custom_call.1} parent=55 // pred_check
          %p482 = pneg %p134
        $region58: #{tpu_custom_call.1} parent=55 // pred_check_branch
          %484 = sbr.rel (%p482) target = $region60
        $region59: #{tpu_custom_call.1} parent=55 // pred_region
          %s485 = sand.u32 %s119, 1
          %s486 = scalar_lea.sflag [#allocation5], %s485
          %s487 = sand.u32 %s119, 1
          %s488 = smul.addr %s487, 64
          %s489 = scalar_lea.vmem [#allocation8], %s488
          %490 = dma.done %s486, 1024
        $region60: #{tpu_custom_call.1} parent=55 // pred_fallthru
          _
      $region56: #{tpu_custom_call.1} parent=5 // pred_fallthru
        _
    $region6: #{tpu_custom_call.1} parent=1 // loop_footer
      %s22 = sadd.s32 1, %s18
    $region7: #{tpu_custom_call.1} parent=1 // loop_footer_branch
      %17 = sbr.rel target = $region3
    $region8: #{tpu_custom_call.1} parent=1 // loop_exit
      _
    %491 = vsyncpa [#allocation4], 1
    %s492 = scalar_lea.sflag [#allocation4], 1
    %493 = vsyncpa %s492, 1
    %494 = vsyncpa [#allocation7], 1
    %s495 = scalar_lea.sflag [#allocation7], 1
    %496 = vsyncpa %s495, 1
    %497 = vsyncpa [#allocation5], 1
    %s498 = scalar_lea.sflag [#allocation5], 1
    %499 = vsyncpa %s498, 1

</llo_original>
